<compile_context>
chip_gen: v7x
topology: tpu7x:2x2x1
jax: 0.10.0
libtpu: 0.0.40
codegen_flags: <defaults>
</compile_context>

<pallas_src>
import math
from functools import partial

import jax
import jax.numpy as jnp
from jax import lax
from jax.experimental import pallas as pl
from jax.experimental.pallas import tpu as pltpu


# ---------------------------------------------------------------------------
# Kernel bodies
# ---------------------------------------------------------------------------
def _sdpa_compute(q, k, v, mask, ctx_ref, attn_ref):
    """q:(G,TQ,dk)  k:(G,Lk,dk)  v:(G,Lk,dv)  mask: int8, broadcastable to (G,TQ,Lk) or None."""
    d_k = q.shape[-1]
    scale = 1.0 / math.sqrt(d_k)
    # Fold the scale into the (small) q tile: Lq*d_k multiplies instead of Lq*Lk.
    qs = q * jnp.asarray(scale, dtype=q.dtype)

    # scores = (Q/sqrt(dk)) @ K^T -- contract the native last dims, no K transpose.
    scores = lax.dot_general(
        qs, k,
        dimension_numbers=(((2,), (2,)), ((0,), (0,))),
        preferred_element_type=jnp.float32)

    if mask is not None:
        # Broadcast-compatible mask block (leading / sublane / lane broadcasts are cheap).
        scores = jnp.where(mask != 0, jnp.float32(-1.0e9), scores)

    # Numerically-stable softmax over the key axis (fp32).
    scores = scores - jnp.max(scores, axis=-1, keepdims=True)
    e = jnp.exp(scores)
    denom = jnp.sum(e, axis=-1, keepdims=True)
    # Exact reciprocal: attn is a returned output and must sum to 1 to ~f32 precision.
    attn = e * (jnp.float32(1.0) / denom)

    # context = attn @ V  (probabilities cast to V's dtype for the MXU).
    ctx = lax.dot_general(
        attn.astype(v.dtype), v,
        dimension_numbers=(((2,), (1,)), ((0,), (0,))),
        preferred_element_type=jnp.float32)

    attn_ref[...] = attn.astype(attn_ref.dtype)
    ctx_ref[...] = ctx.astype(ctx_ref.dtype)


def _sdpa_kernel_masked(q_ref, k_ref, v_ref, m_ref, ctx_ref, attn_ref):
    _sdpa_compute(q_ref[...], k_ref[...], v_ref[...], m_ref[...], ctx_ref, attn_ref)


def _sdpa_kernel_nomask(q_ref, k_ref, v_ref, ctx_ref, attn_ref):
    _sdpa_compute(q_ref[...], k_ref[...], v_ref[...], None, ctx_ref, attn_ref)


# ---------------------------------------------------------------------------
# Tiling / VMEM heuristics
# ---------------------------------------------------------------------------
def _vmem_budget():
    """(block budget bytes, vmem_limit_bytes) chosen per TPU generation."""
    cap = None
    try:
        cap = int(pltpu.get_tpu_info().vmem_capacity_bytes)
    except Exception:
        cap = None
    if cap is None:
        cap = 64 * 1024 * 1024                      # unknown -> assume v7x-sized VMEM
    if cap >= 100 * 1024 * 1024:                    # v5e / v6e: 128 MiB physical
        return 64 * 1024 * 1024, 96 * 1024 * 1024
    return 26 * 1024 * 1024, 40 * 1024 * 1024       # v7x: 64 MiB physical


def _largest_divisor(n, cap, multiple):
    """Largest divisor of n that is a multiple of `multiple` and <= cap (or None)."""
    best = None
    d = multiple
    cap = min(cap, n)
    while d <= cap:
        if n % d == 0:
            best = d
        d += multiple
    return best


def _pick_tiles(BH, H, Lq, Lk, d_k, d_v, in_isize, out_isize, attn_isize,
                has_mask, need_h_div):
    """Pick (G heads/step, TQ query rows/step, vmem_limit_bytes)."""
    budget, vmem_limit = _vmem_budget()

    # TQ: MXU-aligned (multiples of 128 preferred) and bounded so the fp32 softmax
    # intermediates (~3 * TQ * Lk * 4 bytes) stay within ~1/3 of the budget.
    cap = min(1024, max(128, (budget // 3) // max(1, 12 * Lk)))
    if Lq <= cap:
        tq = Lq
    else:
        tq = None
        for mult in (128, 64, 32, 16, 8):
            tq = _largest_divisor(Lq, cap, mult)
            if tq is not None:
                break
        if tq is None:
            tq = Lq   # no nice divisor: single q tile (may exceed the soft budget)

    def est(g):
        # double-buffered input + output blocks, plus fp32 intermediates (single copy)
        in_blk = g * (tq * d_k + Lk * d_k + Lk * d_v) * in_isize
        out_blk = g * (tq * d_v * out_isize + tq * Lk * attn_isize)
        msk = g * tq * Lk if has_mask else 0          # int8, worst case (non-broadcast)
        interm = g * (3 * tq * Lk + tq * d_k) * 4
        return 2 * (in_blk + out_blk + msk) + interm

    g = 1
    for cand in range(1, BH + 1):
        if BH % cand:
            continue
        if need_h_div and (cand > H or H % cand):
            continue                                   # head groups must align with mask
        if est(cand) > budget:
            continue
        if BH // cand < 2 and BH >= 2:
            continue                                   # keep >=2 head-group steps (megacore)
        g = cand
    return g, tq, vmem_limit


# ---------------------------------------------------------------------------
# Mask handling: keep the natural broadcast shape, reuse via index_map
# ---------------------------------------------------------------------------
def _normalize_mask(attn_mask, B, H, Lq, Lk):
    """Return (mask int8 array (lead, mq, mk), lead_kind, mq, mk)."""
    m = jnp.asarray(attn_mask)
    m = m.reshape((1,) * (4 - m.ndim) + m.shape)       # pad to 4D
    mb, mh, mq, mk = m.shape
    if mb not in (1, B) or mh not in (1, H) or mq not in (1, Lq) or mk not in (1, Lk):
        m = jnp.broadcast_to(m, (B, H, Lq, Lk))
        mb, mh, mq, mk = B, H, Lq, Lk
    m = (m != 0).astype(jnp.int8)                      # int8 stream: 4x less DMA than int32
    if mb == B and mh == H:
        return m.reshape(B * H, mq, mk), "bh", mq, mk
    if mb == B:                                        # mask broadcast over heads
        return m.reshape(B, mq, mk), "b", mq, mk
    if mh == H:                                        # mask broadcast over batch
        return m.reshape(H, mq, mk), "h", mq, mk
    return m.reshape(1, mq, mk), "one", mq, mk         # pure (Lq,Lk)-style mask


def _mask_spec(lead_kind, G, H, TQ, Lq, mq, mk, Lk):
    gm = G if lead_kind in ("bh", "h") else 1
    tqm = TQ if mq == Lq else 1
    lkm = Lk if mk == Lk else 1
    hpg = max(1, H // G)                               # head groups per batch

    if lead_kind == "bh":
        def lead(b): return b
    elif lead_kind == "b":
        def lead(b): return b // hpg
    elif lead_kind == "h":
        def lead(b): return b % hpg
    else:
        def lead(b): return 0

    if mq == Lq:
        def qblk(qi): return qi
    else:
        def qblk(qi): return 0

    return pl.BlockSpec((gm, tqm, lkm), lambda b, qi: (lead(b), qblk(qi), 0))


# ---------------------------------------------------------------------------
# Public wrapper
# ---------------------------------------------------------------------------
@partial(jax.jit, static_argnames=("attn_dtype",))
def scaled_dot_product_attention(Q, K, V, attn_mask=None, *, attn_dtype=None):
    """Q:(B,H,Lq,dk)  K:(B,H,Lk,dk)  V:(B,H,Lk,dv); attn_mask broadcastable to
    (B,H,Lq,Lk), truthy == masked out (torch masked_fill_ convention of the module).
    Returns (context, attn) like the PyTorch module."""
    B, H, Lq, d_k = Q.shape
    Lk = K.shape[2]
    d_v = V.shape[3]
    BH = B * H

    q = Q.reshape(BH, Lq, d_k)
    k = K.reshape(BH, Lk, d_k)
    v = V.reshape(BH, Lk, d_v)

    out_dtype = Q.dtype
    if attn_dtype is None:
        attn_dtype = jnp.result_type(Q.dtype, K.dtype)

    has_mask = attn_mask is not None
    if has_mask:
        mask3, lead_kind, mq, mk = _normalize_mask(attn_mask, B, H, Lq, Lk)
        need_h_div = lead_kind in ("b", "h")
    else:
        mask3, lead_kind, mq, mk, need_h_div = None, None, 0, 0, False

    G, TQ, vmem_limit = _pick_tiles(
        BH, H, Lq, Lk, d_k, d_v,
        jnp.dtype(Q.dtype).itemsize,
        jnp.dtype(out_dtype).itemsize,
        jnp.dtype(attn_dtype).itemsize,
        has_mask, need_h_div)
    grid = (BH // G, Lq // TQ)

    in_specs = [
        pl.BlockSpec((G, TQ, d_k), lambda b, qi: (b, qi, 0)),
        pl.BlockSpec((G, Lk, d_k), lambda b, qi: (b, 0, 0)),   # resident across q-tiles
        pl.BlockSpec((G, Lk, d_v), lambda b, qi: (b, 0, 0)),   # resident across q-tiles
    ]
    args = [q, k, v]

    flops = 2 * BH * Lq * Lk * (d_k + d_v)
    bytes_accessed = (q.size * jnp.dtype(q.dtype).itemsize
                      + k.size * jnp.dtype(k.dtype).itemsize
                      + v.size * jnp.dtype(v.dtype).itemsize
                      + BH * Lq * d_v * jnp.dtype(out_dtype).itemsize
                      + BH * Lq * Lk * jnp.dtype(attn_dtype).itemsize)

    if has_mask:
        in_specs.append(_mask_spec(lead_kind, G, H, TQ, Lq, mq, mk, Lk))
        args.append(mask3)
        bytes_accessed += int(mask3.size)
        kernel = _sdpa_kernel_masked
    else:
        kernel = _sdpa_kernel_nomask        # mask-free variant: no zero-mask alloc/DMA

    ctx, attn = pl.pallas_call(
        kernel,
        out_shape=(
            jax.ShapeDtypeStruct((BH, Lq, d_v), out_dtype),
            jax.ShapeDtypeStruct((BH, Lq, Lk), attn_dtype),
        ),
        grid_spec=pltpu.PrefetchScalarGridSpec(
            num_scalar_prefetch=0,
            grid=grid,
            in_specs=in_specs,
            out_specs=[
                pl.BlockSpec((G, TQ, d_v), lambda b, qi: (b, qi, 0)),
                pl.BlockSpec((G, TQ, Lk), lambda b, qi: (b, qi, 0)),
            ],
        ),
        compiler_params=pltpu.CompilerParams(
            # head-group axis parallel (megacore), q-tile axis sequential so the
            # resident K/V blocks are not re-DMA'd by the second core.
            dimension_semantics=("parallel", "arbitrary"),
            vmem_limit_bytes=vmem_limit),
        cost_estimate=pl.CostEstimate(
            flops=flops,
            transcendentals=BH * Lq * Lk,
            bytes_accessed=bytes_accessed),
    )(*args)

    return ctx.reshape(B, H, Lq, d_v), attn.reshape(B, H, Lq, Lk)


# ---------------------------------------------------------------------------
# Reference + self-test
# ---------------------------------------------------------------------------
def _reference(Q, K, V, attn_mask=None):
    d_k = K.shape[-1]
    scores = jnp.einsum("bhqd,bhkd->bhqk", Q, K,
                        precision=lax.Precision.HIGHEST) / jnp.sqrt(jnp.float32(d_k))
    if attn_mask is not None:
        scores = jnp.where(attn_mask, jnp.float32(-1.0e9), scores)
    attn = jax.nn.softmax(scores, axis=-1)
    ctx = jnp.einsum("bhqk,bhkd->bhqd", attn, V, precision=lax.Precision.HIGHEST)
    return ctx, attn


if __name__ == "__main__":
    B, H, Lq, Lk, d_k, d_v = 2, 4, 8, 8, 32, 32

    key = jax.random.PRNGKey(0)
    kq, kk, kv, km = jax.random.split(key, 4)
    Q = jax.random.normal(kq, (B, H, Lq, d_k), dtype=jnp.float32)
    K = jax.random.normal(kk, (B, H, Lk, d_k), dtype=jnp.float32)
    V = jax.random.normal(kv, (B, H, Lk, d_v), dtype=jnp.float32)
    full_mask = jax.random.bernoulli(km, 0.25, (B, H, Lq, Lk))     # (B,H,Lq,Lk)
    bcast_mask = full_mask[:, :1]                                   # (B,1,Lq,Lk) broadcast

    for mask in (full_mask, bcast_mask, None):
        ctx, attn = scaled_dot_product_attention(Q, K, V, mask)
        jax.block_until_ready((ctx, attn))
        ctx_ref, attn_ref = _reference(Q, K, V, mask)
        assert jnp.allclose(ctx, ctx_ref, atol=2e-4, rtol=2e-4), "ctx mismatch"
        assert jnp.allclose(attn, attn_ref, atol=2e-4, rtol=2e-4), "attn mismatch"

    print("KERNEL_OK")
</pallas_src>

<mosaic_0001>
module attributes {stable_mosaic.version = 11 : i64} {
  func.func @_sdpa_kernel_masked(%arg0: i32, %arg1: i32, %arg2: memref<4x8x32xf32, #tpu.memory_space<vmem>>, %arg3: memref<4x8x32xf32, #tpu.memory_space<vmem>>, %arg4: memref<4x8x32xf32, #tpu.memory_space<vmem>>, %arg5: memref<4x8x8xi8, #tpu.memory_space<vmem>>, %arg6: memref<4x8x32xf32, #tpu.memory_space<vmem>>, %arg7: memref<4x8x8xf32, #tpu.memory_space<vmem>>) attributes {dimension_semantics = [#tpu.dimension_semantics<parallel>, #tpu.dimension_semantics<arbitrary>], iteration_bounds = array<i64: 2, 1>, scalar_prefetch = 0 : i64, scratch_operands = 0 : i64, tpu.core_type = #tpu.core_type<tc>, window_params = [{transform_indices = @transform_0, window_bounds = array<i64: 4, 8, 32>}, {transform_indices = @transform_1, window_bounds = array<i64: 4, 8, 32>}, {transform_indices = @transform_2, window_bounds = array<i64: 4, 8, 32>}, {transform_indices = @transform_3, window_bounds = array<i64: 4, 8, 8>}, {transform_indices = @transform_4, window_bounds = array<i64: 4, 8, 32>}, {transform_indices = @transform_5, window_bounds = array<i64: 4, 8, 8>}]} {
    %c0 = arith.constant 0 : index
    %c0_0 = arith.constant 0 : index
    %c0_1 = arith.constant 0 : index
    %0 = vector.load %arg2[%c0, %c0_0, %c0_1] : memref<4x8x32xf32, #tpu.memory_space<vmem>>, vector<4x8x32xf32>
    %c0_2 = arith.constant 0 : index
    %c0_3 = arith.constant 0 : index
    %c0_4 = arith.constant 0 : index
    %1 = vector.load %arg3[%c0_2, %c0_3, %c0_4] : memref<4x8x32xf32, #tpu.memory_space<vmem>>, vector<4x8x32xf32>
    %c0_5 = arith.constant 0 : index
    %c0_6 = arith.constant 0 : index
    %c0_7 = arith.constant 0 : index
    %2 = vector.load %arg4[%c0_5, %c0_6, %c0_7] : memref<4x8x32xf32, #tpu.memory_space<vmem>>, vector<4x8x32xf32>
    %c0_8 = arith.constant 0 : index
    %c0_9 = arith.constant 0 : index
    %c0_10 = arith.constant 0 : index
    %3 = vector.load %arg5[%c0_8, %c0_9, %c0_10] : memref<4x8x8xi8, #tpu.memory_space<vmem>>, vector<4x8x8xi8>
    %cst = arith.constant 0.176776692 : f32
    %4 = vector.broadcast %cst : f32 to vector<4x8x32xf32>
    %5 = arith.mulf %0, %4 : vector<4x8x32xf32>
    %cst_11 = arith.constant dense<0.000000e+00> : vector<4x8x8xf32>
    %6 = tpu.matmul %5, %1, %cst_11 {dimension_numbers = #tpu.dot_dimension_numbers<[2], [2], [1], [1], [0, 0, 0, 1, 1, 1], [0], [0]>} : vector<4x8x32xf32>, vector<4x8x32xf32>, vector<4x8x8xf32> -> vector<4x8x8xf32>
    %c0_i8 = arith.constant 0 : i8
    %7 = vector.broadcast %c0_i8 : i8 to vector<4x8x8xi8>
    %8 = arith.cmpi ne, %3, %7 : vector<4x8x8xi8>
    %cst_12 = arith.constant -1.000000e+09 : f32
    %9 = vector.broadcast %cst_12 : f32 to vector<4x8x8xf32>
    %10 = arith.select %8, %9, %6 : vector<4x8x8xi1>, vector<4x8x8xf32>
    %cst_13 = arith.constant dense<0xFF800000> : vector<4x8xf32>
    %11 = vector.multi_reduction <maximumf>, %10, %cst_13 [2] : vector<4x8x8xf32> to vector<4x8xf32>
    %12 = vector.shape_cast %11 : vector<4x8xf32> to vector<4x8x1xf32>
    %13 = vector.broadcast %12 : vector<4x8x1xf32> to vector<4x8x8xf32>
    %14 = arith.subf %10, %13 : vector<4x8x8xf32>
    %15 = math.exp %14 : vector<4x8x8xf32>
    %cst_14 = arith.constant dense<0.000000e+00> : vector<4x8xf32>
    %16 = vector.multi_reduction <add>, %15, %cst_14 [2] : vector<4x8x8xf32> to vector<4x8xf32>
    %17 = vector.shape_cast %16 : vector<4x8xf32> to vector<4x8x1xf32>
    %cst_15 = arith.constant 1.000000e+00 : f32
    %18 = vector.broadcast %cst_15 : f32 to vector<4x8x1xf32>
    %19 = arith.divf %18, %17 : vector<4x8x1xf32>
    %20 = vector.broadcast %19 : vector<4x8x1xf32> to vector<4x8x8xf32>
    %21 = arith.mulf %15, %20 : vector<4x8x8xf32>
    %cst_16 = arith.constant dense<0.000000e+00> : vector<4x8x32xf32>
    %22 = tpu.matmul %21, %2, %cst_16 {dimension_numbers = #tpu.dot_dimension_numbers<[2], [1], [1], [2], [0, 0, 0, 1, 1, 2], [0], [0]>} : vector<4x8x8xf32>, vector<4x8x32xf32>, vector<4x8x32xf32> -> vector<4x8x32xf32>
    %c0_17 = arith.constant 0 : index
    %c0_18 = arith.constant 0 : index
    %c0_19 = arith.constant 0 : index
    %23 = vector.load %arg7[%c0_17, %c0_18, %c0_19] : memref<4x8x8xf32, #tpu.memory_space<vmem>>, vector<4x8x8xf32>
    tpu.vector_store %arg7[%c0_17, %c0_18, %c0_19], %21 {strides = array<i32>} : memref<4x8x8xf32, #tpu.memory_space<vmem>>, vector<4x8x8xf32>,
    %c0_20 = arith.constant 0 : index
    %c0_21 = arith.constant 0 : index
    %c0_22 = arith.constant 0 : index
    %24 = vector.load %arg6[%c0_20, %c0_21, %c0_22] : memref<4x8x32xf32, #tpu.memory_space<vmem>>, vector<4x8x32xf32>
    tpu.vector_store %arg6[%c0_20, %c0_21, %c0_22], %22 {strides = array<i32>} : memref<4x8x32xf32, #tpu.memory_space<vmem>>, vector<4x8x32xf32>,
    return
  }
  func.func @transform_0(%arg0: i32, %arg1: i32) -> (i32, i32, i32) {
    %c0_i32 = arith.constant 0 : i32
    %c0_i32_0 = arith.constant 0 : i32
    return %arg0, %arg1, %c0_i32 : i32, i32, i32
  }
  func.func @transform_1(%arg0: i32, %arg1: i32) -> (i32, i32, i32) {
    %c0_i32 = arith.constant 0 : i32
    %c0_i32_0 = arith.constant 0 : i32
    %c0_i32_1 = arith.constant 0 : i32
    return %arg0, %c0_i32, %c0_i32_0 : i32, i32, i32
  }
  func.func @transform_2(%arg0: i32, %arg1: i32) -> (i32, i32, i32) {
    %c0_i32 = arith.constant 0 : i32
    %c0_i32_0 = arith.constant 0 : i32
    %c0_i32_1 = arith.constant 0 : i32
    return %arg0, %c0_i32, %c0_i32_0 : i32, i32, i32
  }
  func.func @transform_3(%arg0: i32, %arg1: i32) -> (i32, i32, i32) {
    %c0_i32 = arith.constant 0 : i32
    %c0_i32_0 = arith.constant 0 : i32
    return %arg0, %arg1, %c0_i32 : i32, i32, i32
  }
  func.func @transform_4(%arg0: i32, %arg1: i32) -> (i32, i32, i32) {
    %c0_i32 = arith.constant 0 : i32
    %c0_i32_0 = arith.constant 0 : i32
    return %arg0, %arg1, %c0_i32 : i32, i32, i32
  }
  func.func @transform_5(%arg0: i32, %arg1: i32) -> (i32, i32, i32) {
    %c0_i32 = arith.constant 0 : i32
    %c0_i32_0 = arith.constant 0 : i32
    return %arg0, %arg1, %c0_i32 : i32, i32, i32
  }
}

</mosaic_0001>

<llo_original>
// kernel: scaled_dot_product_attention.1
$region0: #{scaled_dot_product_attention.1}
  #allocation0 [shape = 'u32[]', space=smem, size = 0x4, offset = 0x4, fixed_abs, tag = 'smem constant byte address 0x4 - core index']
  #allocation1 [shape = 'u32[144,128]{1,0:T(1,128)}', space=vmem, size = 0x12000, scoped, tag = 'internal scratch']
  %s0 = inlined_call_operand.hbm [shape: f32[8,8,32], index: 0, kind: input, shape index: {}]
  %s1 = inlined_call_operand.hbm [shape: f32[8,8,32], index: 1, kind: input, shape index: {}]
  %s2 = inlined_call_operand.hbm [shape: f32[8,8,32], index: 2, kind: input, shape index: {}]
  %s3 = inlined_call_operand.vmem [shape: s8[8,8,8], index: 3, kind: input, shape index: {}]
  %s4 = inlined_call_operand.hbm [shape: f32[8,8,32], index: 4, kind: output, shape index: {0}]
  %s5 = inlined_call_operand.hbm [shape: f32[8,8,8], index: 5, kind: output, shape index: {1}]
  %6 = xla_tuple %s4, %s5
  %s7 = sld [smem:[#allocation0]]
  $region69: #{scaled_dot_product_attention.1} parent=0
    _
  %s9 = ssub.s32 1, %s7
  %s10 = scalar_select 0, %s9, %s7
  $region1: #{scaled_dot_product_attention.1} parent=0
    #allocation2 [shape = 'u8[32768]{0}', space=vmem, size = 0x8000, scoped, tag = 'input window, operand 0']
    #allocation3 [shape = 's32[2]{0}', space=sflag, size = 0x8, scoped, tag = 'scoped memory for scaled_dot_product_attention.1']
    #allocation4 [shape = 's32[2]{0}', space=sflag, size = 0x8, scoped, tag = 'scoped memory for scaled_dot_product_attention.1']
    #allocation5 [shape = 'u8[32768]{0}', space=vmem, size = 0x8000, scoped, tag = 'input window, operand 1']
    #allocation6 [shape = 's32[2]{0}', space=sflag, size = 0x8, scoped, tag = 'scoped memory for scaled_dot_product_attention.1']
    #allocation7 [shape = 'u8[32768]{0}', space=vmem, size = 0x8000, scoped, tag = 'input window, operand 2']
    #allocation8 [shape = 'u8[32768]{0}', space=vmem, size = 0x8000, scoped, tag = 'output window, operand 0']
    #allocation9 [shape = 'u8[32768]{0}', space=vmem, size = 0x8000, scoped, tag = 'output window, operand 1']
    #allocation10 [shape = 's32[2]{0}', space=sflag, size = 0x8, scoped, tag = 'scoped memory for scaled_dot_product_attention.1']
    %11 = vsyncpa [#allocation3], 0
    %s12 = scalar_lea.sflag [#allocation3], 1
    %13 = vsyncpa %s12, 0
    %14 = vsyncpa [#allocation6], 0
    %s15 = scalar_lea.sflag [#allocation6], 1
    %16 = vsyncpa %s15, 0
    %17 = vsyncpa [#allocation4], 0
    %s18 = scalar_lea.sflag [#allocation4], 1
    %19 = vsyncpa %s18, 0
    %20 = vsyncpa [#allocation10], 0
    %s21 = scalar_lea.sflag [#allocation10], 1
    %22 = vsyncpa %s21, 0
    loop: start=0, step=1, limit=4
    $region2: #{scaled_dot_product_attention.1} parent=1 // loop_pre_header
      _
    $region3: #{scaled_dot_product_attention.1} parent=1 // loop_header
      %s24 = sphi 0, %s28
      %p25 = scmp.ge.s32.totalorder %s24, 4
      %s31 = sphi 0, %s43
      %s32 = sphi 0, %s39
      %s33 = sphi 0, %s31
      %s34 = sphi 0, %s32
      %s35 = sphi 0, %s33
      %s36 = sphi 0, %s34
      %s48 = sphi 0, %s50
      %s51 = sphi 0, %s48
      %s52 = sphi 0, %s51
      %s68 = sphi 0, %s52
      %s74 = sphi 0, %s76
      %s77 = sphi 0, %s74
      %s78 = sphi 0, %s77
      %s94 = sphi 0, %s78
      %s100 = sphi 0, %s102
      %s103 = sphi 0, %s100
      %s104 = sphi 0, %s103
      %s120 = sphi 0, %s104
      %s128 = sphi 0, %s130
      %s131 = sphi 0, %s128
      %s132 = sphi 0, %s131
      %s148 = sphi 0, %s132
      %s156 = sphi 0, %s158
      %s159 = sphi 0, %s156
      %s160 = sphi 0, %s159
      %s176 = sphi 0, %s160
      %s184 = sphi 0, %s186
      %s187 = sphi 0, %s184
      %s188 = sphi 0, %s187
      %s204 = sphi 0, %s188
    $region4: #{scaled_dot_product_attention.1} parent=1 // loop_header_branch
      %27 = sbr.rel (%p25) target = $region8
    $region5: #{scaled_dot_product_attention.1} parent=1 // loop_body
      %s29 = ssub.s32 %s24, 1
      %s30 = ssub.s32 %s24, 2
      %s37 = sadd.s32 1, %s32
      %p38 = scmp.ge.s32.totalorder %s37, 1
      %s39 = scalar_select %p38, 0, %s37
      %s40 = sadd.s32 1, %s31
      %s41 = scalar_select %p38, %s40, %s31
      %p42 = scmp.ge.s32.totalorder %s41, 2
      %s43 = scalar_select %p42, 0, %s41
      %s44 = ssub.s32 %s31, %s43
      %s45 = ssub.s32 %s32, %s39
      %s46 = sor.u32 %s44, %s45
      %p47 = scmp.eq.s32.totalorder %s46, 0
      %s49 = sadd.s32 %s48, 1
      %s50 = scalar_select %p47, %s48, %s49
      %p53 = pneg %p47
      %p54 = scmp.eq.s32.totalorder %s24, 1
      %p55 = por %p53, %p54
      %p56 = scmp.ne.s32.totalorder %s48, %s51
      %p57 = scmp.eq.s32.totalorder %s24, 0
      %p58 = por %p56, %p57
      %p59 = scmp.ne.s32.totalorder %s48, %s51
      %p60 = scmp.eq.s32.totalorder %s29, 1
      %p61 = por %p59, %p60
      %p62 = scmp.ne.s32.totalorder %s51, %s52
      %p63 = scmp.eq.s32.totalorder %s29, 0
      %p64 = por %p62, %p63
      %p65 = scmp.ne.s32.totalorder %s51, %s52
      %p66 = scmp.eq.s32.totalorder %s30, 1
      %p67 = por %p65, %p66
      %p69 = scmp.ne.s32.totalorder %s52, %s68
      %p70 = scmp.eq.s32.totalorder %s30, 0
      %p71 = por %p69, %p70
      %s72 = ssub.s32 %s31, %s43
      %p73 = scmp.eq.s32.totalorder %s72, 0
      %s75 = sadd.s32 %s74, 1
      %s76 = scalar_select %p73, %s74, %s75
      %p79 = pneg %p73
      %p80 = scmp.eq.s32.totalorder %s24, 1
      %p81 = por %p79, %p80
      %p82 = scmp.ne.s32.totalorder %s74, %s77
      %p83 = scmp.eq.s32.totalorder %s24, 0
      %p84 = por %p82, %p83
      %p85 = scmp.ne.s32.totalorder %s74, %s77
      %p86 = scmp.eq.s32.totalorder %s29, 1
      %p87 = por %p85, %p86
      %p88 = scmp.ne.s32.totalorder %s77, %s78
      %p89 = scmp.eq.s32.totalorder %s29, 0
      %p90 = por %p88, %p89
      %p91 = scmp.ne.s32.totalorder %s77, %s78
      %p92 = scmp.eq.s32.totalorder %s30, 1
      %p93 = por %p91, %p92
      %p95 = scmp.ne.s32.totalorder %s78, %s94
      %p96 = scmp.eq.s32.totalorder %s30, 0
      %p97 = por %p95, %p96
      %s98 = ssub.s32 %s31, %s43
      %p99 = scmp.eq.s32.totalorder %s98, 0
      %s101 = sadd.s32 %s100, 1
      %s102 = scalar_select %p99, %s100, %s101
      %p105 = pneg %p99
      %p106 = scmp.eq.s32.totalorder %s24, 1
      %p107 = por %p105, %p106
      %p108 = scmp.ne.s32.totalorder %s100, %s103
      %p109 = scmp.eq.s32.totalorder %s24, 0
      %p110 = por %p108, %p109
      %p111 = scmp.ne.s32.totalorder %s100, %s103
      %p112 = scmp.eq.s32.totalorder %s29, 1
      %p113 = por %p111, %p112
      %p114 = scmp.ne.s32.totalorder %s103, %s104
      %p115 = scmp.eq.s32.totalorder %s29, 0
      %p116 = por %p114, %p115
      %p117 = scmp.ne.s32.totalorder %s103, %s104
      %p118 = scmp.eq.s32.totalorder %s30, 1
      %p119 = por %p117, %p118
      %p121 = scmp.ne.s32.totalorder %s104, %s120
      %p122 = scmp.eq.s32.totalorder %s30, 0
      %p123 = por %p121, %p122
      %s124 = ssub.s32 %s31, %s43
      %s125 = ssub.s32 %s32, %s39
      %s126 = sor.u32 %s124, %s125
      %p127 = scmp.eq.s32.totalorder %s126, 0
      %s129 = sadd.s32 %s128, 1
      %s130 = scalar_select %p127, %s128, %s129
      %p133 = pneg %p127
      %p134 = scmp.eq.s32.totalorder %s24, 1
      %p135 = por %p133, %p134
      %p136 = scmp.ne.s32.totalorder %s128, %s131
      %p137 = scmp.eq.s32.totalorder %s24, 0
      %p138 = por %p136, %p137
      %p139 = scmp.ne.s32.totalorder %s128, %s131
      %p140 = scmp.eq.s32.totalorder %s29, 1
      %p141 = por %p139, %p140
      %p142 = scmp.ne.s32.totalorder %s131, %s132
      %p143 = scmp.eq.s32.totalorder %s29, 0
      %p144 = por %p142, %p143
      %p145 = scmp.ne.s32.totalorder %s131, %s132
      %p146 = scmp.eq.s32.totalorder %s30, 1
      %p147 = por %p145, %p146
      %p149 = scmp.ne.s32.totalorder %s132, %s148
      %p150 = scmp.eq.s32.totalorder %s30, 0
      %p151 = por %p149, %p150
      %s152 = ssub.s32 %s31, %s43
      %s153 = ssub.s32 %s32, %s39
      %s154 = sor.u32 %s152, %s153
      %p155 = scmp.eq.s32.totalorder %s154, 0
      %s157 = sadd.s32 %s156, 1
      %s158 = scalar_select %p155, %s156, %s157
      %p161 = pneg %p155
      %p162 = scmp.eq.s32.totalorder %s24, 1
      %p163 = por %p161, %p162
      %p164 = scmp.ne.s32.totalorder %s156, %s159
      %p165 = scmp.eq.s32.totalorder %s24, 0
      %p166 = por %p164, %p165
      %p167 = scmp.ne.s32.totalorder %s156, %s159
      %p168 = scmp.eq.s32.totalorder %s29, 1
      %p169 = por %p167, %p168
      %p170 = scmp.ne.s32.totalorder %s159, %s160
      %p171 = scmp.eq.s32.totalorder %s29, 0
      %p172 = por %p170, %p171
      %p173 = scmp.ne.s32.totalorder %s159, %s160
      %p174 = scmp.eq.s32.totalorder %s30, 1
      %p175 = por %p173, %p174
      %p177 = scmp.ne.s32.totalorder %s160, %s176
      %p178 = scmp.eq.s32.totalorder %s30, 0
      %p179 = por %p177, %p178
      %s180 = ssub.s32 %s31, %s43
      %s181 = ssub.s32 %s32, %s39
      %s182 = sor.u32 %s180, %s181
      %p183 = scmp.eq.s32.totalorder %s182, 0
      %s185 = sadd.s32 %s184, 1
      %s186 = scalar_select %p183, %s184, %s185
      %p189 = pneg %p183
      %p190 = scmp.eq.s32.totalorder %s24, 1
      %p191 = por %p189, %p190
      %p192 = scmp.ne.s32.totalorder %s184, %s187
      %p193 = scmp.eq.s32.totalorder %s24, 0
      %p194 = por %p192, %p193
      %p195 = scmp.ne.s32.totalorder %s184, %s187
      %p196 = scmp.eq.s32.totalorder %s29, 1
      %p197 = por %p195, %p196
      %p198 = scmp.ne.s32.totalorder %s187, %s188
      %p199 = scmp.eq.s32.totalorder %s29, 0
      %p200 = por %p198, %p199
      %p201 = scmp.ne.s32.totalorder %s187, %s188
      %p202 = scmp.eq.s32.totalorder %s30, 1
      %p203 = por %p201, %p202
      %p205 = scmp.ne.s32.totalorder %s188, %s204
      %p206 = scmp.eq.s32.totalorder %s30, 0
      %p207 = por %p205, %p206
      %p208 = scmp.le.s32.totalorder 1, %s24
      %p209 = scmp.lt.s32.totalorder %s24, 3
      %p210 = pnand %p208, %p209
      %p211 = pneg %p210
      // Predicated region
      $region9: #{scaled_dot_product_attention.1} parent=5 // pred_check
        _
      $region10: #{scaled_dot_product_attention.1} parent=5 // pred_check_branch
        %213 = sbr.rel (%p210) target = $region12
      $region11: #{scaled_dot_product_attention.1} parent=5 // pred_region
        %s214 = ssub.s32 %s24, 1
      $region12: #{scaled_dot_product_attention.1} parent=5 // pred_fallthru
        _
      %p215 = scmp.lt.s32.totalorder %s24, 2
      // Predicated region
      $region13: #{scaled_dot_product_attention.1} parent=5 // pred_check
        %p216 = pneg %p215
      $region14: #{scaled_dot_product_attention.1} parent=5 // pred_check_branch
        %218 = sbr.rel (%p216) target = $region16
      $region15: #{scaled_dot_product_attention.1} parent=5 // pred_region
        // Predicated region
        $region17: #{scaled_dot_product_attention.1} parent=15 // pred_check
          %p219 = pneg %p58
        $region18: #{scaled_dot_product_attention.1} parent=15 // pred_check_branch
          %221 = sbr.rel (%p219) target = $region20
        $region19: #{scaled_dot_product_attention.1} parent=15 // pred_region
          %s222 = sand.u32 %s48, 1
          %s223 = scalar_lea.sflag [#allocation3], %s222
          %s224 = sand.u32 %s48, 1
          %s225 = smul.addr %s224, 32
          %s226 = scalar_lea.vmem [#allocation2], %s225
          %s227 = smul.u32 4, %s31
          %s229 = ssub.s32 512, 512
          %230 = vsyncadd %s223, %s229
          %s231 = sadd.s32 %s32, %s227
          %s232 = smul.addr %s231, 128
          %s233 = scalar_lea.hbm %s0, %s232
          %s234 = sshll.u32 %s226, 4
          %s235 = int_to_ptr.vmem [resolvable:$true] %s234
          %240 = dma.hbm_to_vmem [thread:$0]  %s233, 512, %s235, %s223, 128, 128, 8
        $region20: #{scaled_dot_product_attention.1} parent=15 // pred_fallthru
          _
        // Predicated region
        $region21: #{scaled_dot_product_attention.1} parent=15 // pred_check
          %p241 = pneg %p84
        $region22: #{scaled_dot_product_attention.1} parent=15 // pred_check_branch
          %243 = sbr.rel (%p241) target = $region24
        $region23: #{scaled_dot_product_attention.1} parent=15 // pred_region
          %s244 = sand.u32 %s24, 1
          %s245 = scalar_lea.sflag [#allocation6], %s244
          %s246 = sand.u32 %s74, 1
          %s247 = smul.addr %s246, 32
          %s248 = scalar_lea.vmem [#allocation5], %s247
          %s249 = smul.u32 4, %s31
          %s251 = ssub.s32 512, 512
          %252 = vsyncadd %s245, %s251
          %s253 = smul.addr %s249, 128
          %s254 = scalar_lea.hbm %s1, %s253
          %s255 = sshll.u32 %s248, 4
          %s256 = int_to_ptr.vmem [resolvable:$true] %s255
          %261 = dma.hbm_to_vmem [thread:$0]  %s254, 512, %s256, %s245, 128, 128, 8
        $region24: #{scaled_dot_product_attention.1} parent=15 // pred_fallthru
          _
        // Predicated region
        $region25: #{scaled_dot_product_attention.1} parent=15 // pred_check
          %p262 = pneg %p110
        $region26: #{scaled_dot_product_attention.1} parent=15 // pred_check_branch
          %264 = sbr.rel (%p262) target = $region28
        $region27: #{scaled_dot_product_attention.1} parent=15 // pred_region
          %s265 = sand.u32 %s24, 1
          %s266 = scalar_lea.sflag [#allocation6], %s265
          %s267 = sand.u32 %s100, 1
          %s268 = smul.addr %s267, 32
          %s269 = scalar_lea.vmem [#allocation7], %s268
          %s270 = smul.u32 4, %s31
          %s272 = ssub.s32 512, 512
          %273 = vsyncadd %s266, %s272
          %s274 = smul.addr %s270, 128
          %s275 = scalar_lea.hbm %s2, %s274
          %s276 = sshll.u32 %s269, 4
          %s277 = int_to_ptr.vmem [resolvable:$true] %s276
          %282 = dma.hbm_to_vmem [thread:$0]  %s275, 512, %s277, %s266, 128, 128, 8
        $region28: #{scaled_dot_product_attention.1} parent=15 // pred_fallthru
          _
        // Predicated region
        $region29: #{scaled_dot_product_attention.1} parent=15 // pred_check
          %p283 = pneg %p138
        $region30: #{scaled_dot_product_attention.1} parent=15 // pred_check_branch
          %285 = sbr.rel (%p283) target = $region32
        $region31: #{scaled_dot_product_attention.1} parent=15 // pred_region
          %s286 = smul.u32 4, %s31
          %p287 = scmp.lt.s32.totalorder %s286, 7
          %s288 = scalar_select %p287, %s286, 7
          %p289 = scmp.lt.s32.totalorder %s32, 0
          %s290 = scalar_select %p289, %s32, 0
          %s291 = sadd.s32 %s290, %s288
          %s292 = smul.addr %s291, 2
          %s293 = scalar_lea.vmem %s3, %s292
          %s294 = smul.u32 4, %s31
        $region32: #{scaled_dot_product_attention.1} parent=15 // pred_fallthru
          _
      $region16: #{scaled_dot_product_attention.1} parent=5 // pred_fallthru
        _
      %p295 = scmp.le.s32.totalorder 1, %s24
      %p296 = scmp.lt.s32.totalorder %s24, 3
      %p297 = pnand %p295, %p296
      %p298 = pneg %p297
      // Predicated region
      $region33: #{scaled_dot_product_attention.1} parent=5 // pred_check
        _
      $region34: #{scaled_dot_product_attention.1} parent=5 // pred_check_branch
        %300 = sbr.rel (%p297) target = $region36
      $region35: #{scaled_dot_product_attention.1} parent=5 // pred_region
        %s301 = ssub.s32 %s24, 1
        %s302 = sand.u32 %s51, 1
        %s303 = scalar_lea.sflag [#allocation3], %s302
        %s304 = sand.u32 %s51, 1
        %s305 = smul.addr %s304, 32
        %s306 = scalar_lea.vmem [#allocation2], %s305
        // Predicated region
        $region37: #{scaled_dot_product_attention.1} parent=35 // pred_check
          %p307 = pneg %p64
        $region38: #{scaled_dot_product_attention.1} parent=35 // pred_check_branch
          %309 = sbr.rel (%p307) target = $region40
        $region39: #{scaled_dot_product_attention.1} parent=35 // pred_region
          %310 = dma.done %s303, 512
        $region40: #{scaled_dot_product_attention.1} parent=35 // pred_fallthru
          _
        %s311 = sand.u32 %s29, 1
        %s312 = scalar_lea.sflag [#allocation6], %s311
        %s313 = sand.u32 %s77, 1
        %s314 = smul.addr %s313, 32
        %s315 = scalar_lea.vmem [#allocation5], %s314
        // Predicated region
        $region41: #{scaled_dot_product_attention.1} parent=35 // pred_check
          %p316 = pneg %p90
        $region42: #{scaled_dot_product_attention.1} parent=35 // pred_check_branch
          %318 = sbr.rel (%p316) target = $region44
        $region43: #{scaled_dot_product_attention.1} parent=35 // pred_region
          %319 = dma.done %s312, 512
        $region44: #{scaled_dot_product_attention.1} parent=35 // pred_fallthru
          _
        %s320 = sand.u32 %s29, 1
        %s321 = scalar_lea.sflag [#allocation6], %s320
        %s322 = sand.u32 %s103, 1
        %s323 = smul.addr %s322, 32
        %s324 = scalar_lea.vmem [#allocation7], %s323
        // Predicated region
        $region45: #{scaled_dot_product_attention.1} parent=35 // pred_check
          %p325 = pneg %p116
        $region46: #{scaled_dot_product_attention.1} parent=35 // pred_check_branch
          %327 = sbr.rel (%p325) target = $region48
        $region47: #{scaled_dot_product_attention.1} parent=35 // pred_region
          %328 = dma.done %s321, 512
        $region48: #{scaled_dot_product_attention.1} parent=35 // pred_fallthru
          _
        %s329 = sand.u32 %s51, 1
        %s330 = scalar_lea.sflag [#allocation3], %s329
        %s331 = sand.u32 %s51, 1
        %s332 = smul.addr %s331, 32
        %s333 = scalar_lea.vmem [#allocation2], %s332
        %p334 = pneg %p64
        %p335 = pneg %p61
        %s336 = sand.u32 %s29, 1
        %s337 = scalar_lea.sflag [#allocation6], %s336
        %s338 = sand.u32 %s77, 1
        %s339 = smul.addr %s338, 32
        %s340 = scalar_lea.vmem [#allocation5], %s339
        %p341 = pneg %p90
        %p342 = pneg %p87
        %s343 = sand.u32 %s29, 1
        %s344 = scalar_lea.sflag [#allocation6], %s343
        %s345 = sand.u32 %s103, 1
        %s346 = smul.addr %s345, 32
        %s347 = scalar_lea.vmem [#allocation7], %s346
        %p348 = pneg %p116
        %p349 = pneg %p113
        %s350 = smul.u32 4, %s33
        %p351 = scmp.lt.s32.totalorder %s350, 7
        %s352 = scalar_select %p351, %s350, 7
        %p353 = scmp.lt.s32.totalorder %s34, 0
        %s354 = scalar_select %p353, %s34, 0
        %s355 = sadd.s32 %s354, %s352
        %s356 = smul.addr %s355, 2
        %s357 = scalar_lea.vmem %s3, %s356
        %p358 = pneg %p144
        %p359 = pneg %p141
        %p360 = pneg %p172
        %p361 = pneg %p169
        %s362 = sand.u32 %s159, 1
        %s363 = scalar_lea.sflag [#allocation4], %s362
        %s364 = sand.u32 %s159, 1
        %s365 = smul.addr %s364, 32
        %s366 = scalar_lea.vmem [#allocation8], %s365
        %p367 = pneg %p200
        %p368 = pneg %p197
        %s369 = sand.u32 %s187, 1
        %s370 = scalar_lea.sflag [#allocation10], %s369
        %s371 = sand.u32 %s187, 1
        %s372 = smul.addr %s371, 32
        %s373 = scalar_lea.vmem [#allocation9], %s372
        %s374 = smul.u32 4, %s33
        %s375 = smul.u32 4, %s33
        %s376 = smul.u32 4, %s33
        %s377 = smul.u32 4, %s33
        %p378 = scmp.lt.s32.totalorder %s377, 7
        %s379 = scalar_select %p378, %s377, 7
        %p380 = scmp.lt.s32.totalorder %s34, 0
        %s381 = scalar_select %p380, %s34, 0
        %s382 = sadd.s32 %s381, %s379
        %s383 = smul.addr %s382, 2
        %s384 = scalar_lea.vmem %s3, %s383
        %s385 = smul.u32 4, %s33
        %s386 = smul.u32 4, %s33
        %s387 = smul.u32 4, %s33
        %v390 = vld [vmem:[%s306] sm:$0xff]
        %v391 = vld [vmem:[%s306 + $0x8] sm:$0xff]
        %v392 = vld [vmem:[%s306 + $0x10] sm:$0xff]
        %v393 = vld [vmem:[%s306 + $0x18] sm:$0xff]
        %v394 = vld [vmem:[%s315] sm:$0xff]
        %v395 = vld [vmem:[%s315 + $0x8] sm:$0xff]
        %v396 = vld [vmem:[%s315 + $0x10] sm:$0xff]
        %v397 = vld [vmem:[%s315 + $0x18] sm:$0xff]
        %v398 = vld [vmem:[%s324] sm:$0xff]
        %v399 = vld [vmem:[%s324 + $0x8] sm:$0xff]
        %v400 = vld [vmem:[%s324 + $0x10] sm:$0xff]
        %v401 = vld [vmem:[%s324 + $0x18] sm:$0xff]
        %v402 = vld [vmem:[%s384] sm:$0x3]
        %v403 = vld [vmem:[%s384 + $0x2] sm:$0x3]
        %v404 = vld [vmem:[%s384 + $0x4] sm:$0x3]
        %v405 = vld [vmem:[%s384 + $0x6] sm:$0x3]
        %v406 = vmul.f32 %v390, 0.17677669
        %v407 = vmul.f32 %v391, 0.17677669
        %v408 = vmul.f32 %v392, 0.17677669
        %v409 = vmul.f32 %v393, 0.17677669
        %vm410 = vcmask 261120
        %v412 = vsel %vm410, %v406, 0
        %v415 = vsel %vm410, %v394, 0
        %417 = vmatprep.subr.mxu0 0.0
        %418 = vmatpush1.xpose.msra.mxu0 %v415
        %419 = vmatprep.subr.mxu0 0.0
        %420 = vmatpush1.xpose.msra.mxu0 0.0
        %421 = vmatprep.subr.mxu0 0.0
        %422 = vmatpush1.xpose.msra.mxu0 0.0
        %423 = vmatprep.subr.mxu0 0.0
        %424 = vmatpush1.xpose.msra.mxu0 0.0
        %425 = vmatprep.subr.mxu0 0.0
        %426 = vmatpush1.xpose.msra.mxu0 0.0
        %427 = vmatprep.subr.mxu0 0.0
        %428 = vmatpush1.xpose.msra.mxu0 0.0
        %429 = vmatprep.subr.mxu0 0.0
        %430 = vmatpush1.xpose.msra.mxu0 0.0
        %431 = vmatprep.subr.mxu0 0.0
        %432 = vmatpush1.xpose.msra.mxu0 0.0
        %433 = vmatprep.subr.mxu0 0.0
        %434 = vmatpush1.xpose.msra.mxu0 0.0
        %435 = vmatprep.subr.mxu0 0.0
        %436 = vmatpush1.xpose.msra.mxu0 0.0
        %437 = vmatprep.subr.mxu0 0.0
        %438 = vmatpush1.xpose.msra.mxu0 0.0
        %439 = vmatprep.subr.mxu0 0.0
        %440 = vmatpush1.xpose.msra.mxu0 0.0
        %441 = vmatprep.subr.mxu0 0.0
        %442 = vmatpush1.xpose.msra.mxu0 0.0
        %443 = vmatprep.subr.mxu0 0.0
        %444 = vmatpush1.xpose.msra.mxu0 0.0
        %445 = vmatprep.subr.mxu0 0.0
        %446 = vmatpush1.xpose.msra.mxu0 0.0
        %447 = vmatprep.subr.mxu0 0.0
        %448 = vmatpush1.xpose.msra.mxu0 0.0
        %449 = vmatprep.subr.mxu0 0.0
        %450 = vmatpush1.xpose.msra.mxu0 0.0
        %451 = vmatprep.subr.mxu0 0.0
        %452 = vmatpush1.xpose.msra.mxu0 0.0
        %453 = vmatprep.subr.mxu0 0.0
        %454 = vmatpush1.xpose.msra.mxu0 0.0
        %455 = vmatprep.subr.mxu0 0.0
        %456 = vmatpush1.xpose.msra.mxu0 0.0
        %457 = vmatprep.subr.mxu0 0.0
        %458 = vmatpush1.xpose.msra.mxu0 0.0
        %459 = vmatprep.subr.mxu0 0.0
        %460 = vmatpush1.xpose.msra.mxu0 0.0
        %461 = vmatprep.subr.mxu0 0.0
        %462 = vmatpush1.xpose.msra.mxu0 0.0
        %463 = vmatprep.subr.mxu0 0.0
        %464 = vmatpush1.xpose.msra.mxu0 0.0
        %465 = vmatprep.subr.mxu0 0.0
        %466 = vmatpush1.xpose.msra.mxu0 0.0
        %467 = vmatprep.subr.mxu0 0.0
        %468 = vmatpush1.xpose.msra.mxu0 0.0
        %469 = vmatprep.subr.mxu0 0.0
        %470 = vmatpush1.xpose.msra.mxu0 0.0
        %471 = vmatprep.subr.mxu0 0.0
        %472 = vmatpush1.xpose.msra.mxu0 0.0
        %473 = vmatprep.subr.mxu0 0.0
        %474 = vmatpush1.xpose.msra.mxu0 0.0
        %475 = vmatprep.subr.mxu0 0.0
        %476 = vmatpush1.xpose.msra.mxu0 0.0
        %477 = vmatprep.subr.mxu0 0.0
        %478 = vmatpush1.xpose.msra.mxu0 0.0
        %479 = vmatprep.subr.mxu0 0.0
        %480 = vmatpush1.xpose.msra.mxu0 0.0
        %481 = vmatprep.mubr.f32.mxu0 0.0
        %482 = vmatmul.mubr.f32.gmra.mrb[0].mxu0 %v412
        %v483 = vpop.f32.mrb[0].mxu0
        %v484 = vadd.f32 0.0, %v483
        %v485 = vpop.f32.mrb[0].mxu0
        %486 = vdwg.mxu0
        %v488 = vsel %vm410, %v407, 0
        %v491 = vsel %vm410, %v395, 0
        %493 = vmatprep.subr.mxu0 0.0
        %494 = vmatpush1.xpose.msra.mxu0 %v491
        %495 = vmatprep.subr.mxu0 0.0
        %496 = vmatpush1.xpose.msra.mxu0 0.0
        %497 = vmatprep.subr.mxu0 0.0
        %498 = vmatpush1.xpose.msra.mxu0 0.0
        %499 = vmatprep.subr.mxu0 0.0
        %500 = vmatpush1.xpose.msra.mxu0 0.0
        %501 = vmatprep.subr.mxu0 0.0
        %502 = vmatpush1.xpose.msra.mxu0 0.0
        %503 = vmatprep.subr.mxu0 0.0
        %504 = vmatpush1.xpose.msra.mxu0 0.0
        %505 = vmatprep.subr.mxu0 0.0
        %506 = vmatpush1.xpose.msra.mxu0 0.0
        %507 = vmatprep.subr.mxu0 0.0
        %508 = vmatpush1.xpose.msra.mxu0 0.0
        %509 = vmatprep.subr.mxu0 0.0
        %510 = vmatpush1.xpose.msra.mxu0 0.0
        %511 = vmatprep.subr.mxu0 0.0
        %512 = vmatpush1.xpose.msra.mxu0 0.0
        %513 = vmatprep.subr.mxu0 0.0
        %514 = vmatpush1.xpose.msra.mxu0 0.0
        %515 = vmatprep.subr.mxu0 0.0
        %516 = vmatpush1.xpose.msra.mxu0 0.0
        %517 = vmatprep.subr.mxu0 0.0
        %518 = vmatpush1.xpose.msra.mxu0 0.0
        %519 = vmatprep.subr.mxu0 0.0
        %520 = vmatpush1.xpose.msra.mxu0 0.0
        %521 = vmatprep.subr.mxu0 0.0
        %522 = vmatpush1.xpose.msra.mxu0 0.0
        %523 = vmatprep.subr.mxu0 0.0
        %524 = vmatpush1.xpose.msra.mxu0 0.0
        %525 = vmatprep.subr.mxu0 0.0
        %526 = vmatpush1.xpose.msra.mxu0 0.0
        %527 = vmatprep.subr.mxu0 0.0
        %528 = vmatpush1.xpose.msra.mxu0 0.0
        %529 = vmatprep.subr.mxu0 0.0
        %530 = vmatpush1.xpose.msra.mxu0 0.0
        %531 = vmatprep.subr.mxu0 0.0
        %532 = vmatpush1.xpose.msra.mxu0 0.0
        %533 = vmatprep.subr.mxu0 0.0
        %534 = vmatpush1.xpose.msra.mxu0 0.0
        %535 = vmatprep.subr.mxu0 0.0
        %536 = vmatpush1.xpose.msra.mxu0 0.0
        %537 = vmatprep.subr.mxu0 0.0
        %538 = vmatpush1.xpose.msra.mxu0 0.0
        %539 = vmatprep.subr.mxu0 0.0
        %540 = vmatpush1.xpose.msra.mxu0 0.0
        %541 = vmatprep.subr.mxu0 0.0
        %542 = vmatpush1.xpose.msra.mxu0 0.0
        %543 = vmatprep.subr.mxu0 0.0
        %544 = vmatpush1.xpose.msra.mxu0 0.0
        %545 = vmatprep.subr.mxu0 0.0
        %546 = vmatpush1.xpose.msra.mxu0 0.0
        %547 = vmatprep.subr.mxu0 0.0
        %548 = vmatpush1.xpose.msra.mxu0 0.0
        %549 = vmatprep.subr.mxu0 0.0
        %550 = vmatpush1.xpose.msra.mxu0 0.0
        %551 = vmatprep.subr.mxu0 0.0
        %552 = vmatpush1.xpose.msra.mxu0 0.0
        %553 = vmatprep.subr.mxu0 0.0
        %554 = vmatpush1.xpose.msra.mxu0 0.0
        %555 = vmatprep.subr.mxu0 0.0
        %556 = vmatpush1.xpose.msra.mxu0 0.0
        %557 = vmatprep.mubr.f32.mxu0 0.0
        %558 = vmatmul.mubr.f32.gmra.mrb[0].mxu0 %v488
        %v559 = vpop.f32.mrb[0].mxu0
        %v560 = vadd.f32 0.0, %v559
        %v561 = vpop.f32.mrb[0].mxu0
        %562 = vdwg.mxu0
        %v564 = vsel %vm410, %v408, 0
        %v567 = vsel %vm410, %v396, 0
        %569 = vmatprep.subr.mxu0 0.0
        %570 = vmatpush1.xpose.msra.mxu0 %v567
        %571 = vmatprep.subr.mxu0 0.0
        %572 = vmatpush1.xpose.msra.mxu0 0.0
        %573 = vmatprep.subr.mxu0 0.0
        %574 = vmatpush1.xpose.msra.mxu0 0.0
        %575 = vmatprep.subr.mxu0 0.0
        %576 = vmatpush1.xpose.msra.mxu0 0.0
        %577 = vmatprep.subr.mxu0 0.0
        %578 = vmatpush1.xpose.msra.mxu0 0.0
        %579 = vmatprep.subr.mxu0 0.0
        %580 = vmatpush1.xpose.msra.mxu0 0.0
        %581 = vmatprep.subr.mxu0 0.0
        %582 = vmatpush1.xpose.msra.mxu0 0.0
        %583 = vmatprep.subr.mxu0 0.0
        %584 = vmatpush1.xpose.msra.mxu0 0.0
        %585 = vmatprep.subr.mxu0 0.0
        %586 = vmatpush1.xpose.msra.mxu0 0.0
        %587 = vmatprep.subr.mxu0 0.0
        %588 = vmatpush1.xpose.msra.mxu0 0.0
        %589 = vmatprep.subr.mxu0 0.0
        %590 = vmatpush1.xpose.msra.mxu0 0.0
        %591 = vmatprep.subr.mxu0 0.0
        %592 = vmatpush1.xpose.msra.mxu0 0.0
        %593 = vmatprep.subr.mxu0 0.0
        %594 = vmatpush1.xpose.msra.mxu0 0.0
        %595 = vmatprep.subr.mxu0 0.0
        %596 = vmatpush1.xpose.msra.mxu0 0.0
        %597 = vmatprep.subr.mxu0 0.0
        %598 = vmatpush1.xpose.msra.mxu0 0.0
        %599 = vmatprep.subr.mxu0 0.0
        %600 = vmatpush1.xpose.msra.mxu0 0.0
        %601 = vmatprep.subr.mxu0 0.0
        %602 = vmatpush1.xpose.msra.mxu0 0.0
        %603 = vmatprep.subr.mxu0 0.0
        %604 = vmatpush1.xpose.msra.mxu0 0.0
        %605 = vmatprep.subr.mxu0 0.0
        %606 = vmatpush1.xpose.msra.mxu0 0.0
        %607 = vmatprep.subr.mxu0 0.0
        %608 = vmatpush1.xpose.msra.mxu0 0.0
        %609 = vmatprep.subr.mxu0 0.0
        %610 = vmatpush1.xpose.msra.mxu0 0.0
        %611 = vmatprep.subr.mxu0 0.0
        %612 = vmatpush1.xpose.msra.mxu0 0.0
        %613 = vmatprep.subr.mxu0 0.0
        %614 = vmatpush1.xpose.msra.mxu0 0.0
        %615 = vmatprep.subr.mxu0 0.0
        %616 = vmatpush1.xpose.msra.mxu0 0.0
        %617 = vmatprep.subr.mxu0 0.0
        %618 = vmatpush1.xpose.msra.mxu0 0.0
        %619 = vmatprep.subr.mxu0 0.0
        %620 = vmatpush1.xpose.msra.mxu0 0.0
        %621 = vmatprep.subr.mxu0 0.0
        %622 = vmatpush1.xpose.msra.mxu0 0.0
        %623 = vmatprep.subr.mxu0 0.0
        %624 = vmatpush1.xpose.msra.mxu0 0.0
        %625 = vmatprep.subr.mxu0 0.0
        %626 = vmatpush1.xpose.msra.mxu0 0.0
        %627 = vmatprep.subr.mxu0 0.0
        %628 = vmatpush1.xpose.msra.mxu0 0.0
        %629 = vmatprep.subr.mxu0 0.0
        %630 = vmatpush1.xpose.msra.mxu0 0.0
        %631 = vmatprep.subr.mxu0 0.0
        %632 = vmatpush1.xpose.msra.mxu0 0.0
        %633 = vmatprep.mubr.f32.mxu0 0.0
        %634 = vmatmul.mubr.f32.gmra.mrb[0].mxu0 %v564
        %v635 = vpop.f32.mrb[0].mxu0
        %v636 = vadd.f32 0.0, %v635
        %v637 = vpop.f32.mrb[0].mxu0
        %638 = vdwg.mxu0
        %v640 = vsel %vm410, %v409, 0
        %v643 = vsel %vm410, %v397, 0
        %645 = vmatprep.subr.mxu0 0.0
        %646 = vmatpush1.xpose.msra.mxu0 %v643
        %647 = vmatprep.subr.mxu0 0.0
        %648 = vmatpush1.xpose.msra.mxu0 0.0
        %649 = vmatprep.subr.mxu0 0.0
        %650 = vmatpush1.xpose.msra.mxu0 0.0
        %651 = vmatprep.subr.mxu0 0.0
        %652 = vmatpush1.xpose.msra.mxu0 0.0
        %653 = vmatprep.subr.mxu0 0.0
        %654 = vmatpush1.xpose.msra.mxu0 0.0
        %655 = vmatprep.subr.mxu0 0.0
        %656 = vmatpush1.xpose.msra.mxu0 0.0
        %657 = vmatprep.subr.mxu0 0.0
        %658 = vmatpush1.xpose.msra.mxu0 0.0
        %659 = vmatprep.subr.mxu0 0.0
        %660 = vmatpush1.xpose.msra.mxu0 0.0
        %661 = vmatprep.subr.mxu0 0.0
        %662 = vmatpush1.xpose.msra.mxu0 0.0
        %663 = vmatprep.subr.mxu0 0.0
        %664 = vmatpush1.xpose.msra.mxu0 0.0
        %665 = vmatprep.subr.mxu0 0.0
        %666 = vmatpush1.xpose.msra.mxu0 0.0
        %667 = vmatprep.subr.mxu0 0.0
        %668 = vmatpush1.xpose.msra.mxu0 0.0
        %669 = vmatprep.subr.mxu0 0.0
        %670 = vmatpush1.xpose.msra.mxu0 0.0
        %671 = vmatprep.subr.mxu0 0.0
        %672 = vmatpush1.xpose.msra.mxu0 0.0
        %673 = vmatprep.subr.mxu0 0.0
        %674 = vmatpush1.xpose.msra.mxu0 0.0
        %675 = vmatprep.subr.mxu0 0.0
        %676 = vmatpush1.xpose.msra.mxu0 0.0
        %677 = vmatprep.subr.mxu0 0.0
        %678 = vmatpush1.xpose.msra.mxu0 0.0
        %679 = vmatprep.subr.mxu0 0.0
        %680 = vmatpush1.xpose.msra.mxu0 0.0
        %681 = vmatprep.subr.mxu0 0.0
        %682 = vmatpush1.xpose.msra.mxu0 0.0
        %683 = vmatprep.subr.mxu0 0.0
        %684 = vmatpush1.xpose.msra.mxu0 0.0
        %685 = vmatprep.subr.mxu0 0.0
        %686 = vmatpush1.xpose.msra.mxu0 0.0
        %687 = vmatprep.subr.mxu0 0.0
        %688 = vmatpush1.xpose.msra.mxu0 0.0
        %689 = vmatprep.subr.mxu0 0.0
        %690 = vmatpush1.xpose.msra.mxu0 0.0
        %691 = vmatprep.subr.mxu0 0.0
        %692 = vmatpush1.xpose.msra.mxu0 0.0
        %693 = vmatprep.subr.mxu0 0.0
        %694 = vmatpush1.xpose.msra.mxu0 0.0
        %695 = vmatprep.subr.mxu0 0.0
        %696 = vmatpush1.xpose.msra.mxu0 0.0
        %697 = vmatprep.subr.mxu0 0.0
        %698 = vmatpush1.xpose.msra.mxu0 0.0
        %699 = vmatprep.subr.mxu0 0.0
        %700 = vmatpush1.xpose.msra.mxu0 0.0
        %701 = vmatprep.subr.mxu0 0.0
        %702 = vmatpush1.xpose.msra.mxu0 0.0
        %703 = vmatprep.subr.mxu0 0.0
        %704 = vmatpush1.xpose.msra.mxu0 0.0
        %705 = vmatprep.subr.mxu0 0.0
        %706 = vmatpush1.xpose.msra.mxu0 0.0
        %707 = vmatprep.subr.mxu0 0.0
        %708 = vmatpush1.xpose.msra.mxu0 0.0
        %709 = vmatprep.mubr.f32.mxu0 0.0
        %710 = vmatmul.mubr.f32.gmra.mrb[0].mxu0 %v640
        %v711 = vpop.f32.mrb[0].mxu0
        %v712 = vadd.f32 0.0, %v711
        %v713 = vpop.f32.mrb[0].mxu0
        %714 = vdwg.mxu0
        %vm715 = vnez %v402
        %vm716 = vnez %v403
        %vm717 = vnez %v404
        %vm718 = vnez %v405
        %v719 = vsel %vm715, 16843009, 0
        %v720 = vsel %vm716, 16843009, 0
        %v721 = vsel %vm717, 16843009, 0
        %v722 = vsel %vm718, 16843009, 0
        %v723 = vunpack.c.0.s8 %v719
        %v724 = vunpack.c.0.s8 %v720
        %v725 = vunpack.c.0.s8 %v721
        %v726 = vunpack.c.0.s8 %v722
        %vm727 = vcmp.ne.s32.totalorder %v723, 0
        %vm728 = vcmp.ne.s32.totalorder %v724, 0
        %vm729 = vcmp.ne.s32.totalorder %v725, 0
        %vm730 = vcmp.ne.s32.totalorder %v726, 0
        %v731 = vsel %vm727, -1e+09, %v484
        %v732 = vsel %vm728, -1e+09, %v560
        %v733 = vsel %vm729, -1e+09, %v636
        %v734 = vsel %vm730, -1e+09, %v712
        %vm735 = vcmask 64512
        %v736 = vsel %vm735, %v731, -inf
        %737 = vmax.xlane.f32.xlu0 %v736
        %v738 = vpop.xlane.xlu0 %737
        %v739 = vsel %vm735, %v732, -inf
        %740 = vmax.xlane.f32.xlu0 %v739
        %v741 = vpop.xlane.xlu0 %740
        %v742 = vsel %vm735, %v733, -inf
        %743 = vmax.xlane.f32.xlu0 %v742
        %v744 = vpop.xlane.xlu0 %743
        %v745 = vsel %vm735, %v734, -inf
        %746 = vmax.xlane.f32.xlu0 %v745
        %v747 = vpop.xlane.xlu0 %746
        %v748 = vsub.f32 %v731, %v738
        %v749 = vsub.f32 %v732, %v741
        %v750 = vsub.f32 %v733, %v744
        %v751 = vsub.f32 %v734, %v747
        %v752 = vmul.f32 %v748, 1.442695
        %v753 = vpow.pop %v752
        %v754 = vmul.f32 %v749, 1.442695
        %v755 = vpow.pop %v754
        %v756 = vmul.f32 %v750, 1.442695
        %v757 = vpow.pop %v756
        %v758 = vmul.f32 %v751, 1.442695
        %v759 = vpow.pop %v758
        %v760 = vsel %vm735, %v753, 0.0
        %761 = vadd.xlane.f32.xlu0 %v760
        %v762 = vpop.xlane.xlu0 %761
        %v763 = vsel %vm735, %v755, 0.0
        %764 = vadd.xlane.f32.xlu0 %v763
        %v765 = vpop.xlane.xlu0 %764
        %v766 = vsel %vm735, %v757, 0.0
        %767 = vadd.xlane.f32.xlu0 %v766
        %v768 = vpop.xlane.xlu0 %767
        %v769 = vsel %vm735, %v759, 0.0
        %770 = vadd.xlane.f32.xlu0 %v769
        %v771 = vpop.xlane.xlu0 %770
        %v772 = vrcp.pop %v762
        %v773 = vmul.f32 1.0, %v772
        %v774 = vrcp.pop %v765
        %v775 = vmul.f32 1.0, %v774
        %v776 = vrcp.pop %v768
        %v777 = vmul.f32 1.0, %v776
        %v778 = vrcp.pop %v771
        %v779 = vmul.f32 1.0, %v778
        %v780 = vmul.f32 %v753, %v773
        %v781 = vmul.f32 %v755, %v775
        %v782 = vmul.f32 %v757, %v777
        %v783 = vmul.f32 %v759, %v779
        %v785 = vsel %vm735, %v780, 0
        %787 = vmatprep.subr.mxu0 0.0
        %788 = vmatpush1.msra.mxu0 %v398
        %789 = vmatprep.subr.mxu0 0.0
        %790 = vmatpush1.msra.mxu0 0.0
        %791 = vmatprep.subr.mxu0 0.0
        %792 = vmatpush1.msra.mxu0 0.0
        %793 = vmatprep.subr.mxu0 0.0
        %794 = vmatpush1.msra.mxu0 0.0
        %795 = vmatprep.subr.mxu0 0.0
        %796 = vmatpush1.msra.mxu0 0.0
        %797 = vmatprep.subr.mxu0 0.0
        %798 = vmatpush1.msra.mxu0 0.0
        %799 = vmatprep.subr.mxu0 0.0
        %800 = vmatpush1.msra.mxu0 0.0
        %801 = vmatprep.subr.mxu0 0.0
        %802 = vmatpush1.msra.mxu0 0.0
        %803 = vmatprep.subr.mxu0 0.0
        %804 = vmatpush1.msra.mxu0 0.0
        %805 = vmatprep.subr.mxu0 0.0
        %806 = vmatpush1.msra.mxu0 0.0
        %807 = vmatprep.subr.mxu0 0.0
        %808 = vmatpush1.msra.mxu0 0.0
        %809 = vmatprep.subr.mxu0 0.0
        %810 = vmatpush1.msra.mxu0 0.0
        %811 = vmatprep.subr.mxu0 0.0
        %812 = vmatpush1.msra.mxu0 0.0
        %813 = vmatprep.subr.mxu0 0.0
        %814 = vmatpush1.msra.mxu0 0.0
        %815 = vmatprep.subr.mxu0 0.0
        %816 = vmatpush1.msra.mxu0 0.0
        %817 = vmatprep.subr.mxu0 0.0
        %818 = vmatpush1.msra.mxu0 0.0
        %819 = vmatprep.subr.mxu0 0.0
        %820 = vmatpush1.msra.mxu0 0.0
        %821 = vmatprep.subr.mxu0 0.0
        %822 = vmatpush1.msra.mxu0 0.0
        %823 = vmatprep.subr.mxu0 0.0
        %824 = vmatpush1.msra.mxu0 0.0
        %825 = vmatprep.subr.mxu0 0.0
        %826 = vmatpush1.msra.mxu0 0.0
        %827 = vmatprep.subr.mxu0 0.0
        %828 = vmatpush1.msra.mxu0 0.0
        %829 = vmatprep.subr.mxu0 0.0
        %830 = vmatpush1.msra.mxu0 0.0
        %831 = vmatprep.subr.mxu0 0.0
        %832 = vmatpush1.msra.mxu0 0.0
        %833 = vmatprep.subr.mxu0 0.0
        %834 = vmatpush1.msra.mxu0 0.0
        %835 = vmatprep.subr.mxu0 0.0
        %836 = vmatpush1.msra.mxu0 0.0
        %837 = vmatprep.subr.mxu0 0.0
        %838 = vmatpush1.msra.mxu0 0.0
        %839 = vmatprep.subr.mxu0 0.0
        %840 = vmatpush1.msra.mxu0 0.0
        %841 = vmatprep.subr.mxu0 0.0
        %842 = vmatpush1.msra.mxu0 0.0
        %843 = vmatprep.subr.mxu0 0.0
        %844 = vmatpush1.msra.mxu0 0.0
        %845 = vmatprep.subr.mxu0 0.0
        %846 = vmatpush1.msra.mxu0 0.0
        %847 = vmatprep.subr.mxu0 0.0
        %848 = vmatpush1.msra.mxu0 0.0
        %849 = vmatprep.subr.mxu0 0.0
        %850 = vmatpush1.msra.mxu0 0.0
        %851 = vmatprep.mubr.f32.mxu0 0.0
        %852 = vmatmul.mubr.f32.gmra.mrb[0].mxu0 %v785
        %v853 = vpop.f32.mrb[0].mxu0
        %v854 = vadd.f32 0.0, %v853
        %v855 = vpop.f32.mrb[0].mxu0
        %856 = vdwg.mxu0
        %v858 = vsel %vm735, %v781, 0
        %860 = vmatprep.subr.mxu0 0.0
        %861 = vmatpush1.msra.mxu0 %v399
        %862 = vmatprep.subr.mxu0 0.0
        %863 = vmatpush1.msra.mxu0 0.0
        %864 = vmatprep.subr.mxu0 0.0
        %865 = vmatpush1.msra.mxu0 0.0
        %866 = vmatprep.subr.mxu0 0.0
        %867 = vmatpush1.msra.mxu0 0.0
        %868 = vmatprep.subr.mxu0 0.0
        %869 = vmatpush1.msra.mxu0 0.0
        %870 = vmatprep.subr.mxu0 0.0
        %871 = vmatpush1.msra.mxu0 0.0
        %872 = vmatprep.subr.mxu0 0.0
        %873 = vmatpush1.msra.mxu0 0.0
        %874 = vmatprep.subr.mxu0 0.0
        %875 = vmatpush1.msra.mxu0 0.0
        %876 = vmatprep.subr.mxu0 0.0
        %877 = vmatpush1.msra.mxu0 0.0
        %878 = vmatprep.subr.mxu0 0.0
        %879 = vmatpush1.msra.mxu0 0.0
        %880 = vmatprep.subr.mxu0 0.0
        %881 = vmatpush1.msra.mxu0 0.0
        %882 = vmatprep.subr.mxu0 0.0
        %883 = vmatpush1.msra.mxu0 0.0
        %884 = vmatprep.subr.mxu0 0.0
        %885 = vmatpush1.msra.mxu0 0.0
        %886 = vmatprep.subr.mxu0 0.0
        %887 = vmatpush1.msra.mxu0 0.0
        %888 = vmatprep.subr.mxu0 0.0
        %889 = vmatpush1.msra.mxu0 0.0
        %890 = vmatprep.subr.mxu0 0.0
        %891 = vmatpush1.msra.mxu0 0.0
        %892 = vmatprep.subr.mxu0 0.0
        %893 = vmatpush1.msra.mxu0 0.0
        %894 = vmatprep.subr.mxu0 0.0
        %895 = vmatpush1.msra.mxu0 0.0
        %896 = vmatprep.subr.mxu0 0.0
        %897 = vmatpush1.msra.mxu0 0.0
        %898 = vmatprep.subr.mxu0 0.0
        %899 = vmatpush1.msra.mxu0 0.0
        %900 = vmatprep.subr.mxu0 0.0
        %901 = vmatpush1.msra.mxu0 0.0
        %902 = vmatprep.subr.mxu0 0.0
        %903 = vmatpush1.msra.mxu0 0.0
        %904 = vmatprep.subr.mxu0 0.0
        %905 = vmatpush1.msra.mxu0 0.0
        %906 = vmatprep.subr.mxu0 0.0
        %907 = vmatpush1.msra.mxu0 0.0
        %908 = vmatprep.subr.mxu0 0.0
        %909 = vmatpush1.msra.mxu0 0.0
        %910 = vmatprep.subr.mxu0 0.0
        %911 = vmatpush1.msra.mxu0 0.0
        %912 = vmatprep.subr.mxu0 0.0
        %913 = vmatpush1.msra.mxu0 0.0
        %914 = vmatprep.subr.mxu0 0.0
        %915 = vmatpush1.msra.mxu0 0.0
        %916 = vmatprep.subr.mxu0 0.0
        %917 = vmatpush1.msra.mxu0 0.0
        %918 = vmatprep.subr.mxu0 0.0
        %919 = vmatpush1.msra.mxu0 0.0
        %920 = vmatprep.subr.mxu0 0.0
        %921 = vmatpush1.msra.mxu0 0.0
        %922 = vmatprep.subr.mxu0 0.0
        %923 = vmatpush1.msra.mxu0 0.0
        %924 = vmatprep.mubr.f32.mxu0 0.0
        %925 = vmatmul.mubr.f32.gmra.mrb[0].mxu0 %v858
        %v926 = vpop.f32.mrb[0].mxu0
        %v927 = vadd.f32 0.0, %v926
        %v928 = vpop.f32.mrb[0].mxu0
        %929 = vdwg.mxu0
        %v931 = vsel %vm735, %v782, 0
        %933 = vmatprep.subr.mxu0 0.0
        %934 = vmatpush1.msra.mxu0 %v400
        %935 = vmatprep.subr.mxu0 0.0
        %936 = vmatpush1.msra.mxu0 0.0
        %937 = vmatprep.subr.mxu0 0.0
        %938 = vmatpush1.msra.mxu0 0.0
        %939 = vmatprep.subr.mxu0 0.0
        %940 = vmatpush1.msra.mxu0 0.0
        %941 = vmatprep.subr.mxu0 0.0
        %942 = vmatpush1.msra.mxu0 0.0
        %943 = vmatprep.subr.mxu0 0.0
        %944 = vmatpush1.msra.mxu0 0.0
        %945 = vmatprep.subr.mxu0 0.0
        %946 = vmatpush1.msra.mxu0 0.0
        %947 = vmatprep.subr.mxu0 0.0
        %948 = vmatpush1.msra.mxu0 0.0
        %949 = vmatprep.subr.mxu0 0.0
        %950 = vmatpush1.msra.mxu0 0.0
        %951 = vmatprep.subr.mxu0 0.0
        %952 = vmatpush1.msra.mxu0 0.0
        %953 = vmatprep.subr.mxu0 0.0
        %954 = vmatpush1.msra.mxu0 0.0
        %955 = vmatprep.subr.mxu0 0.0
        %956 = vmatpush1.msra.mxu0 0.0
        %957 = vmatprep.subr.mxu0 0.0
        %958 = vmatpush1.msra.mxu0 0.0
        %959 = vmatprep.subr.mxu0 0.0
        %960 = vmatpush1.msra.mxu0 0.0
        %961 = vmatprep.subr.mxu0 0.0
        %962 = vmatpush1.msra.mxu0 0.0
        %963 = vmatprep.subr.mxu0 0.0
        %964 = vmatpush1.msra.mxu0 0.0
        %965 = vmatprep.subr.mxu0 0.0
        %966 = vmatpush1.msra.mxu0 0.0
        %967 = vmatprep.subr.mxu0 0.0
        %968 = vmatpush1.msra.mxu0 0.0
        %969 = vmatprep.subr.mxu0 0.0
        %970 = vmatpush1.msra.mxu0 0.0
        %971 = vmatprep.subr.mxu0 0.0
        %972 = vmatpush1.msra.mxu0 0.0
        %973 = vmatprep.subr.mxu0 0.0
        %974 = vmatpush1.msra.mxu0 0.0
        %975 = vmatprep.subr.mxu0 0.0
        %976 = vmatpush1.msra.mxu0 0.0
        %977 = vmatprep.subr.mxu0 0.0
        %978 = vmatpush1.msra.mxu0 0.0
        %979 = vmatprep.subr.mxu0 0.0
        %980 = vmatpush1.msra.mxu0 0.0
        %981 = vmatprep.subr.mxu0 0.0
        %982 = vmatpush1.msra.mxu0 0.0
        %983 = vmatprep.subr.mxu0 0.0
        %984 = vmatpush1.msra.mxu0 0.0
        %985 = vmatprep.subr.mxu0 0.0
        %986 = vmatpush1.msra.mxu0 0.0
        %987 = vmatprep.subr.mxu0 0.0
        %988 = vmatpush1.msra.mxu0 0.0
        %989 = vmatprep.subr.mxu0 0.0
        %990 = vmatpush1.msra.mxu0 0.0
        %991 = vmatprep.subr.mxu0 0.0
        %992 = vmatpush1.msra.mxu0 0.0
        %993 = vmatprep.subr.mxu0 0.0
        %994 = vmatpush1.msra.mxu0 0.0
        %995 = vmatprep.subr.mxu0 0.0
        %996 = vmatpush1.msra.mxu0 0.0
        %997 = vmatprep.mubr.f32.mxu0 0.0
        %998 = vmatmul.mubr.f32.gmra.mrb[0].mxu0 %v931
        %v999 = vpop.f32.mrb[0].mxu0
        %v1000 = vadd.f32 0.0, %v999
        %v1001 = vpop.f32.mrb[0].mxu0
        %1002 = vdwg.mxu0
        %v1004 = vsel %vm735, %v783, 0
        %1006 = vmatprep.subr.mxu0 0.0
        %1007 = vmatpush1.msra.mxu0 %v401
        %1008 = vmatprep.subr.mxu0 0.0
        %1009 = vmatpush1.msra.mxu0 0.0
        %1010 = vmatprep.subr.mxu0 0.0
        %1011 = vmatpush1.msra.mxu0 0.0
        %1012 = vmatprep.subr.mxu0 0.0
        %1013 = vmatpush1.msra.mxu0 0.0
        %1014 = vmatprep.subr.mxu0 0.0
        %1015 = vmatpush1.msra.mxu0 0.0
        %1016 = vmatprep.subr.mxu0 0.0
        %1017 = vmatpush1.msra.mxu0 0.0
        %1018 = vmatprep.subr.mxu0 0.0
        %1019 = vmatpush1.msra.mxu0 0.0
        %1020 = vmatprep.subr.mxu0 0.0
        %1021 = vmatpush1.msra.mxu0 0.0
        %1022 = vmatprep.subr.mxu0 0.0
        %1023 = vmatpush1.msra.mxu0 0.0
        %1024 = vmatprep.subr.mxu0 0.0
        %1025 = vmatpush1.msra.mxu0 0.0
        %1026 = vmatprep.subr.mxu0 0.0
        %1027 = vmatpush1.msra.mxu0 0.0
        %1028 = vmatprep.subr.mxu0 0.0
        %1029 = vmatpush1.msra.mxu0 0.0
        %1030 = vmatprep.subr.mxu0 0.0
        %1031 = vmatpush1.msra.mxu0 0.0
        %1032 = vmatprep.subr.mxu0 0.0
        %1033 = vmatpush1.msra.mxu0 0.0
        %1034 = vmatprep.subr.mxu0 0.0
        %1035 = vmatpush1.msra.mxu0 0.0
        %1036 = vmatprep.subr.mxu0 0.0
        %1037 = vmatpush1.msra.mxu0 0.0
        %1038 = vmatprep.subr.mxu0 0.0
        %1039 = vmatpush1.msra.mxu0 0.0
        %1040 = vmatprep.subr.mxu0 0.0
        %1041 = vmatpush1.msra.mxu0 0.0
        %1042 = vmatprep.subr.mxu0 0.0
        %1043 = vmatpush1.msra.mxu0 0.0
        %1044 = vmatprep.subr.mxu0 0.0
        %1045 = vmatpush1.msra.mxu0 0.0
        %1046 = vmatprep.subr.mxu0 0.0
        %1047 = vmatpush1.msra.mxu0 0.0
        %1048 = vmatprep.subr.mxu0 0.0
        %1049 = vmatpush1.msra.mxu0 0.0
        %1050 = vmatprep.subr.mxu0 0.0
        %1051 = vmatpush1.msra.mxu0 0.0
        %1052 = vmatprep.subr.mxu0 0.0
        %1053 = vmatpush1.msra.mxu0 0.0
        %1054 = vmatprep.subr.mxu0 0.0
        %1055 = vmatpush1.msra.mxu0 0.0
        %1056 = vmatprep.subr.mxu0 0.0
        %1057 = vmatpush1.msra.mxu0 0.0
        %1058 = vmatprep.subr.mxu0 0.0
        %1059 = vmatpush1.msra.mxu0 0.0
        %1060 = vmatprep.subr.mxu0 0.0
        %1061 = vmatpush1.msra.mxu0 0.0
        %1062 = vmatprep.subr.mxu0 0.0
        %1063 = vmatpush1.msra.mxu0 0.0
        %1064 = vmatprep.subr.mxu0 0.0
        %1065 = vmatpush1.msra.mxu0 0.0
        %1066 = vmatprep.subr.mxu0 0.0
        %1067 = vmatpush1.msra.mxu0 0.0
        %1068 = vmatprep.subr.mxu0 0.0
        %1069 = vmatpush1.msra.mxu0 0.0
        %1070 = vmatprep.mubr.f32.mxu0 0.0
        %1071 = vmatmul.mubr.f32.gmra.mrb[0].mxu0 %v1004
        %v1072 = vpop.f32.mrb[0].mxu0
        %v1073 = vadd.f32 0.0, %v1072
        %v1074 = vpop.f32.mrb[0].mxu0
        %1075 = vdwg.mxu0
        %1076 = vst.msk [vmem:[%s373] sm:$0xff] %vm735, %v780
        %1077 = vst.msk [vmem:[%s373 + $0x8] sm:$0xff] %vm735, %v781
        %1078 = vst.msk [vmem:[%s373 + $0x10] sm:$0xff] %vm735, %v782
        %1079 = vst.msk [vmem:[%s373 + $0x18] sm:$0xff] %vm735, %v783
        %1080 = vst.msk [vmem:[%s366] sm:$0xff] %vm410, %v854
        %1081 = vst.msk [vmem:[%s366 + $0x8] sm:$0xff] %vm410, %v927
        %1082 = vst.msk [vmem:[%s366 + $0x10] sm:$0xff] %vm410, %v1000
        %1083 = vst.msk [vmem:[%s366 + $0x18] sm:$0xff] %vm410, %v1073
        %s1084 = sand.u32 %s159, 1
        %s1085 = scalar_lea.sflag [#allocation4], %s1084
        %s1086 = sand.u32 %s159, 1
        %s1087 = smul.addr %s1086, 32
        %s1088 = scalar_lea.vmem [#allocation8], %s1087
        %s1089 = sand.u32 %s187, 1
        %s1090 = scalar_lea.sflag [#allocation10], %s1089
        %s1091 = sand.u32 %s187, 1
        %s1092 = smul.addr %s1091, 32
        %s1093 = scalar_lea.vmem [#allocation9], %s1092
        // Predicated region
        $region49: #{scaled_dot_product_attention.1} parent=35 // pred_check
          %p1094 = pneg %p169
        $region50: #{scaled_dot_product_attention.1} parent=35 // pred_check_branch
          %1096 = sbr.rel (%p1094) target = $region52
        $region51: #{scaled_dot_product_attention.1} parent=35 // pred_region
          %s1097 = smul.u32 4, %s33
          %s1099 = ssub.s32 512, 512
          %1100 = vsyncadd %s1085, %s1099
          %s1101 = sadd.s32 %s34, %s1097
          %s1102 = smul.addr %s1101, 128
          %s1103 = scalar_lea.hbm %s4, %s1102
          %s1104 = sshll.u32 %s1088, 4
          %s1105 = int_to_ptr.vmem [resolvable:$true] %s1104
          %1110 = dma.vmem_to_hbm [thread:$0]  %s1105, 512, %s1103, %s1085, 128, 128, 8
        $region52: #{scaled_dot_product_attention.1} parent=35 // pred_fallthru
          _
        // Predicated region
        $region53: #{scaled_dot_product_attention.1} parent=35 // pred_check
          %p1111 = pneg %p197
        $region54: #{scaled_dot_product_attention.1} parent=35 // pred_check_branch
          %1113 = sbr.rel (%p1111) target = $region56
        $region55: #{scaled_dot_product_attention.1} parent=35 // pred_region
          %s1114 = smul.u32 4, %s33
          %s1116 = ssub.s32 512, 512
          %1117 = vsyncadd %s1090, %s1116
          %s1118 = sadd.s32 %s34, %s1114
          %s1119 = smul.addr %s1118, 128
          %s1120 = scalar_lea.hbm %s5, %s1119
          %s1121 = sshll.u32 %s1093, 4
          %s1122 = int_to_ptr.vmem [resolvable:$true] %s1121
          %1127 = dma.vmem_to_hbm [thread:$0]  %s1122, 512, %s1120, %s1090, 128, 128, 8
        $region56: #{scaled_dot_product_attention.1} parent=35 // pred_fallthru
          _
      $region36: #{scaled_dot_product_attention.1} parent=5 // pred_fallthru
        _
      %p1128 = scmp.le.s32.totalorder 2, %s24
      // Predicated region
      $region57: #{scaled_dot_product_attention.1} parent=5 // pred_check
        %p1129 = pneg %p1128
      $region58: #{scaled_dot_product_attention.1} parent=5 // pred_check_branch
        %1131 = sbr.rel (%p1129) target = $region60
      $region59: #{scaled_dot_product_attention.1} parent=5 // pred_region
        %s1132 = ssub.s32 %s24, 2
        // Predicated region
        $region61: #{scaled_dot_product_attention.1} parent=59 // pred_check
          %p1133 = pneg %p175
        $region62: #{scaled_dot_product_attention.1} parent=59 // pred_check_branch
          %1135 = sbr.rel (%p1133) target = $region64
        $region63: #{scaled_dot_product_attention.1} parent=59 // pred_region
          %s1136 = sand.u32 %s160, 1
          %s1137 = scalar_lea.sflag [#allocation4], %s1136
          %s1138 = sand.u32 %s160, 1
          %s1139 = smul.addr %s1138, 32
          %s1140 = scalar_lea.vmem [#allocation8], %s1139
          %1141 = dma.done %s1137, 512
        $region64: #{scaled_dot_product_attention.1} parent=59 // pred_fallthru
          _
        // Predicated region
        $region65: #{scaled_dot_product_attention.1} parent=59 // pred_check
          %p1142 = pneg %p203
        $region66: #{scaled_dot_product_attention.1} parent=59 // pred_check_branch
          %1144 = sbr.rel (%p1142) target = $region68
        $region67: #{scaled_dot_product_attention.1} parent=59 // pred_region
          %s1145 = sand.u32 %s188, 1
          %s1146 = scalar_lea.sflag [#allocation10], %s1145
          %s1147 = sand.u32 %s188, 1
          %s1148 = smul.addr %s1147, 32
          %s1149 = scalar_lea.vmem [#allocation9], %s1148
          %1150 = dma.done %s1146, 512
        $region68: #{scaled_dot_product_attention.1} parent=59 // pred_fallthru
          _
      $region60: #{scaled_dot_product_attention.1} parent=5 // pred_fallthru
        _
    $region6: #{scaled_dot_product_attention.1} parent=1 // loop_footer
      %s28 = sadd.s32 1, %s24
    $region7: #{scaled_dot_product_attention.1} parent=1 // loop_footer_branch
      %23 = sbr.rel target = $region3
    $region8: #{scaled_dot_product_attention.1} parent=1 // loop_exit
      _
    %1151 = vsyncpa [#allocation3], 1
    %s1152 = scalar_lea.sflag [#allocation3], 1
    %1153 = vsyncpa %s1152, 1
    %1154 = vsyncpa [#allocation6], 1
    %s1155 = scalar_lea.sflag [#allocation6], 1
    %1156 = vsyncpa %s1155, 1
    %1157 = vsyncpa [#allocation4], 1
    %s1158 = scalar_lea.sflag [#allocation4], 1
    %1159 = vsyncpa %s1158, 1
    %1160 = vsyncpa [#allocation10], 1
    %s1161 = scalar_lea.sflag [#allocation10], 1
    %1162 = vsyncpa %s1161, 1

</llo_original>
